<compile_context>
chip_gen: v7x
topology: tpu7x:2x2x1
jax: 0.10.0
libtpu: 0.0.40
codegen_flags: <defaults>
</compile_context>

<pallas_src>
import jax
import jax.numpy as jnp
from jax.experimental import pallas as pl
from jax.experimental.pallas import tpu as pltpu


_LANE = 128
_SUBLANE = 8
_MIN_PALLAS_ELEMS = 1 << 20   # below this, XLA's fused elementwise wins


def _round_up(x, m):
    return ((x + m - 1) // m) * m


def _selector_kernel(x_ref, tgt_ref, coef_ref, mask_ref, out_ref):
    # x_ref: (TB, TF); tgt/coef/mask: (1, TF) f32 — broadcast over rows in-register.
    # coef = -0.5 / bw^2 precomputed in the wrapper (exact, tolerance-safe).
    e = x_ref[...].astype(jnp.float32) - tgt_ref[...]
    out_ref[...] = (jnp.exp(e * e * coef_ref[...]) * mask_ref[...]).astype(out_ref.dtype)


def _tile_config():
    """Per-generation tile rows / lanes, scoped-VMEM bump, multi-TC split flag."""
    kind = ""
    try:
        kind = jax.devices()[0].device_kind.lower()
    except Exception:
        pass
    if "v7" in kind:
        # 64 MiB VMEM, 3.2 TB/s HBM, 2 TensorCores: big tiles + explicit limit.
        return dict(tb=1024, tf=2048, vmem=48 << 20, split=True)
    if "v6" in kind:
        # 512x2048 f32 tile, in+out double-buffered = 16 MiB < 32 MiB default.
        return dict(tb=512, tf=2048, vmem=None, split=False)
    # v5e / unknown: 256x2048 tile, 8 MiB working set < 16 MiB default scoped VMEM.
    return dict(tb=256, tf=2048, vmem=None, split=False)


def feature_selector_forward(bandwidths, x_batch, target_image, feat_mask,
                             inv=False, out_dtype=None, force_pallas=False):
    """Continuous-feature forward pass of FeatureSelector.

    bandwidths   : any shape with C*W*H elements, (C, W, H) row-major order
    x_batch      : (B, C, W, H)
    target_image : (1, C, W, H)
    feat_mask    : (1, W, H) learnable parameter (detached, as in PyTorch)
    """
    B, C, W, H = x_batch.shape
    # Identity-upsample assumption only holds if mask spatial size == image size.
    assert feat_mask.shape[-2:] == (W, H), "feat_mask spatial size must match image"
    F = C * W * H
    out_dtype = x_batch.dtype if out_dtype is None else out_dtype

    # ---- tiny (F-element) parameter prep in the wrapper (off the hot path) ----
    fm = jax.lax.stop_gradient(feat_mask)
    fm = (1.0 - fm) if inv else fm
    # UpsamplingBilinear2d(size=(W, H)) on a (1, 1, W, H) input is identity here.
    fm_full = jnp.broadcast_to(
        fm.astype(jnp.float32)[:, None, :, :], (1, C, W, H)).reshape(1, F)
    tgt = target_image.astype(jnp.float32).reshape(1, F)
    bw = bandwidths.astype(jnp.float32).reshape(1, F)
    coef = -0.5 / (bw * bw)                      # fold -0.5 and the divide once

    x2 = x_batch.reshape(B, F)                   # metadata-only, lane-dense view

    # ---- small-problem fast path: launch/step overhead dominates below ~1M ----
    if (B * F < _MIN_PALLAS_ELEMS) and not force_pallas:
        e = x2.astype(jnp.float32) - tgt
        out = (jnp.exp(e * e * coef) * fm_full).astype(out_dtype)
        return out.reshape(B, C, W, H)

    # ---- tile selection (no padding; partial edge blocks are masked on store) ----
    cfg = _tile_config()
    TF = F if F <= cfg["tf"] else cfg["tf"]      # full dim or multiple of 128
    TB = B if B <= cfg["tb"] else cfg["tb"]      # full dim or multiple of 8

    # On 2-TC chips (v7x) make sure at least one parallel axis has >= 2 blocks.
    if cfg["split"] and pl.cdiv(F, TF) * pl.cdiv(B, TB) == 1:
        if F >= 2 * _LANE:
            TF = _round_up((F + 1) // 2, _LANE)
        elif B >= 2 * _SUBLANE:
            TB = _round_up((B + 1) // 2, _SUBLANE)

    # Feature axis OUTERMOST so tgt/coef/mask tiles stay resident across rows.
    grid = (pl.cdiv(F, TF), pl.cdiv(B, TB))

    in_bytes = jnp.dtype(x_batch.dtype).itemsize
    out_bytes = jnp.dtype(out_dtype).itemsize
    cost = pl.CostEstimate(
        flops=5 * B * F,
        transcendentals=B * F,
        bytes_accessed=B * F * (in_bytes + out_bytes) + 3 * F * 4,
    )

    cp_kwargs = dict(dimension_semantics=("parallel", "parallel"))
    if cfg["vmem"] is not None:
        cp_kwargs["vmem_limit_bytes"] = cfg["vmem"]

    out = pl.pallas_call(
        _selector_kernel,
        out_shape=jax.ShapeDtypeStruct((B, F), out_dtype),
        grid_spec=pltpu.PrefetchScalarGridSpec(
            num_scalar_prefetch=0,
            grid=grid,
            in_specs=[
                pl.BlockSpec((TB, TF), lambda j, i: (i, j)),   # x_batch rows
                pl.BlockSpec((1, TF), lambda j, i: (0, j)),    # target
                pl.BlockSpec((1, TF), lambda j, i: (0, j)),    # -0.5 / bw^2
                pl.BlockSpec((1, TF), lambda j, i: (0, j)),    # channel-bcast mask
            ],
            out_specs=pl.BlockSpec((TB, TF), lambda j, i: (i, j)),
        ),
        compiler_params=pltpu.CompilerParams(**cp_kwargs),
        cost_estimate=cost,
    )(x2, tgt, coef, fm_full)

    return out.reshape(B, C, W, H)


# TODO(synk): discrete (feature_is_continuous=False) branch references undefined
# `self.bandwidths` / `device` in the original module; only the continuous branch
# is implemented here.
# TODO(synk): no custom_vjp — forward/inference only (feat_mask is detached in
# the reference module as well).


if __name__ == "__main__":
    key = jax.random.PRNGKey(0)
    k1, k2, k3, k4 = jax.random.split(key, 4)

    B, C, W, H = 2, 4, 16, 16

    x_batch = jax.random.normal(k1, (B, C, W, H), dtype=jnp.float32)
    target_image = jax.random.normal(k2, (1, C, W, H), dtype=jnp.float32)
    feat_mask = jax.random.normal(k3, (1, W, H), dtype=jnp.float32)
    bandwidths = jax.random.uniform(
        k4, (C, W, H), dtype=jnp.float32, minval=0.5, maxval=2.0)

    # Force the Pallas path (the auto size-gate would route this tiny case to XLA).
    out = feature_selector_forward(bandwidths, x_batch, target_image, feat_mask,
                                   inv=False, force_pallas=True)
    out = jax.block_until_ready(out)

    # reference check in plain JAX
    bw_r = bandwidths.reshape(1, C, W, H)
    diff = ((x_batch - target_image) * (1.0 / bw_r)) ** 2
    ref = jnp.exp(-0.5 * diff) * feat_mask[None, :, :, :]
    assert out.shape == (B, C, W, H)
    assert jnp.allclose(out, ref, atol=1e-5, rtol=1e-5)

    # also check the small-input fast path agrees
    out2 = jax.block_until_ready(
        feature_selector_forward(bandwidths, x_batch, target_image, feat_mask,
                                 inv=False))
    assert jnp.allclose(out2, ref, atol=1e-5, rtol=1e-5)

    print("KERNEL_OK")
</pallas_src>

<mosaic_0001>
module attributes {stable_mosaic.version = 11 : i64} {
  func.func @_selector_kernel(%arg0: i32, %arg1: i32, %arg2: memref<2x1024xf32, #tpu.memory_space<vmem>>, %arg3: memref<1x1024xf32, #tpu.memory_space<vmem>>, %arg4: memref<1x1024xf32, #tpu.memory_space<vmem>>, %arg5: memref<1x1024xf32, #tpu.memory_space<vmem>>, %arg6: memref<2x1024xf32, #tpu.memory_space<vmem>>) attributes {dimension_semantics = [#tpu.dimension_semantics<parallel>, #tpu.dimension_semantics<parallel>], iteration_bounds = array<i64: 1, 1>, scalar_prefetch = 0 : i64, scratch_operands = 0 : i64, tpu.core_type = #tpu.core_type<tc>, window_params = [{transform_indices = @transform_0, window_bounds = array<i64: 2, 1024>}, {transform_indices = @transform_1, window_bounds = array<i64: 1, 1024>}, {transform_indices = @transform_2, window_bounds = array<i64: 1, 1024>}, {transform_indices = @transform_3, window_bounds = array<i64: 1, 1024>}, {transform_indices = @transform_4, window_bounds = array<i64: 2, 1024>}]} {
    %c0 = arith.constant 0 : index
    %c0_0 = arith.constant 0 : index
    %0 = vector.load %arg2[%c0, %c0_0] : memref<2x1024xf32, #tpu.memory_space<vmem>>, vector<2x1024xf32>
    %c0_1 = arith.constant 0 : index
    %c0_2 = arith.constant 0 : index
    %1 = vector.load %arg3[%c0_1, %c0_2] : memref<1x1024xf32, #tpu.memory_space<vmem>>, vector<1x1024xf32>
    %2 = vector.broadcast %1 : vector<1x1024xf32> to vector<2x1024xf32>
    %3 = arith.subf %0, %2 : vector<2x1024xf32>
    %4 = arith.mulf %3, %3 : vector<2x1024xf32>
    %c0_3 = arith.constant 0 : index
    %c0_4 = arith.constant 0 : index
    %5 = vector.load %arg4[%c0_3, %c0_4] : memref<1x1024xf32, #tpu.memory_space<vmem>>, vector<1x1024xf32>
    %6 = vector.broadcast %5 : vector<1x1024xf32> to vector<2x1024xf32>
    %7 = arith.mulf %4, %6 : vector<2x1024xf32>
    %8 = math.exp %7 : vector<2x1024xf32>
    %c0_5 = arith.constant 0 : index
    %c0_6 = arith.constant 0 : index
    %9 = vector.load %arg5[%c0_5, %c0_6] : memref<1x1024xf32, #tpu.memory_space<vmem>>, vector<1x1024xf32>
    %10 = vector.broadcast %9 : vector<1x1024xf32> to vector<2x1024xf32>
    %11 = arith.mulf %8, %10 : vector<2x1024xf32>
    %c0_7 = arith.constant 0 : index
    %c0_8 = arith.constant 0 : index
    %12 = vector.load %arg6[%c0_7, %c0_8] : memref<2x1024xf32, #tpu.memory_space<vmem>>, vector<2x1024xf32>
    tpu.vector_store %arg6[%c0_7, %c0_8], %11 {strides = array<i32>} : memref<2x1024xf32, #tpu.memory_space<vmem>>, vector<2x1024xf32>,
    return
  }
  func.func @transform_0(%arg0: i32, %arg1: i32) -> (i32, i32) {
    %c0_i32 = arith.constant 0 : i32
    return %arg1, %arg0 : i32, i32
  }
  func.func @transform_1(%arg0: i32, %arg1: i32) -> (i32, i32) {
    %c0_i32 = arith.constant 0 : i32
    %c0_i32_0 = arith.constant 0 : i32
    return %c0_i32, %arg0 : i32, i32
  }
  func.func @transform_2(%arg0: i32, %arg1: i32) -> (i32, i32) {
    %c0_i32 = arith.constant 0 : i32
    %c0_i32_0 = arith.constant 0 : i32
    return %c0_i32, %arg0 : i32, i32
  }
  func.func @transform_3(%arg0: i32, %arg1: i32) -> (i32, i32) {
    %c0_i32 = arith.constant 0 : i32
    %c0_i32_0 = arith.constant 0 : i32
    return %c0_i32, %arg0 : i32, i32
  }
  func.func @transform_4(%arg0: i32, %arg1: i32) -> (i32, i32) {
    %c0_i32 = arith.constant 0 : i32
    return %arg1, %arg0 : i32, i32
  }
}

</mosaic_0001>

<llo_original>
// kernel: tpu_custom_call.1
$region0: #{tpu_custom_call.1}
  #allocation0 [shape = 'u32[]', space=smem, size = 0x4, offset = 0x4, fixed_abs, tag = 'smem constant byte address 0x4 - core index']
  #allocation1 [shape = 'u32[144,128]{1,0:T(1,128)}', space=vmem, size = 0x12000, scoped, tag = 'internal scratch']
  %s0 = inlined_call_operand.hbm [shape: f32[2,1024], index: 0, kind: input, shape index: {}]
  %s1 = inlined_call_operand.hbm [shape: f32[1,1024], index: 1, kind: input, shape index: {}]
  %s2 = inlined_call_operand.hbm [shape: f32[1,1024], index: 2, kind: input, shape index: {}]
  %s3 = inlined_call_operand.vmem [shape: f32[1,1024], index: 3, kind: input, shape index: {}]
  %s4 = inlined_call_operand.hbm [shape: f32[2,1024], index: 4, kind: output, shape index: {}]
  %s5 = sld [smem:[#allocation0]]
  $region38: #{tpu_custom_call.1} parent=0
    _
  %s7 = ssub.s32 1, %s5
  %s8 = scalar_select 0, %s7, %s5
  $region1: #{tpu_custom_call.1} parent=0
    #allocation2 [shape = 'u8[8192]{0}', space=vmem, size = 0x2000, scoped, tag = 'input window, operand 0, single buffered']
    #allocation3 [shape = 's32[1]{0}', space=sflag, size = 0x4, scoped, tag = 'scoped memory for tpu_custom_call.1']
    #allocation4 [shape = 's32[1]{0}', space=sflag, size = 0x4, scoped, tag = 'scoped memory for tpu_custom_call.1']
    #allocation5 [shape = 'u8[4096]{0}', space=vmem, size = 0x1000, scoped, tag = 'input window, operand 1, single buffered']
    #allocation6 [shape = 's32[1]{0}', space=sflag, size = 0x4, scoped, tag = 'scoped memory for tpu_custom_call.1']
    #allocation7 [shape = 'u8[4096]{0}', space=vmem, size = 0x1000, scoped, tag = 'input window, operand 2, single buffered']
    #allocation8 [shape = 'u8[8192]{0}', space=vmem, size = 0x2000, scoped, tag = 'output window, operand 0, single buffered']
    %9 = vsyncpa [#allocation3], 0
    %10 = vsyncpa [#allocation6], 0
    %11 = vsyncpa [#allocation4], 0
    // Predicated region
    $region2: #{tpu_custom_call.1} parent=1 // pred_check
      _
    $region3: #{tpu_custom_call.1} parent=1 // pred_check_branch
      %13 = sbr.rel (0) target = $region5
    $region4: #{tpu_custom_call.1} parent=1 // pred_region
      %s15 = ssub.s32 256, 256
      %16 = vsyncadd [#allocation3], %s15
      %s18 = sshll.u32 [#allocation2], 4
      %s19 = int_to_ptr.vmem [resolvable:$true] %s18
      %21 = dma.hbm_to_vmem [thread:$0]  %s0, 256, %s19, [#allocation3]
    $region5: #{tpu_custom_call.1} parent=1 // pred_fallthru
      _
    // Predicated region
    $region6: #{tpu_custom_call.1} parent=1 // pred_check
      _
    $region7: #{tpu_custom_call.1} parent=1 // pred_check_branch
      %23 = sbr.rel (0) target = $region9
    $region8: #{tpu_custom_call.1} parent=1 // pred_region
      %s25 = ssub.s32 128, 128
      %26 = vsyncadd [#allocation6], %s25
      %s28 = sshll.u32 [#allocation5], 4
      %s29 = int_to_ptr.vmem [resolvable:$true] %s28
      %31 = dma.hbm_to_vmem [thread:$0]  %s1, 128, %s29, [#allocation6]
    $region9: #{tpu_custom_call.1} parent=1 // pred_fallthru
      _
    // Predicated region
    $region10: #{tpu_custom_call.1} parent=1 // pred_check
      _
    $region11: #{tpu_custom_call.1} parent=1 // pred_check_branch
      %33 = sbr.rel (0) target = $region13
    $region12: #{tpu_custom_call.1} parent=1 // pred_region
      %s35 = ssub.s32 128, 128
      %36 = vsyncadd [#allocation6], %s35
      %s38 = sshll.u32 [#allocation7], 4
      %s39 = int_to_ptr.vmem [resolvable:$true] %s38
      %41 = dma.hbm_to_vmem [thread:$0]  %s2, 128, %s39, [#allocation6]
    $region13: #{tpu_custom_call.1} parent=1 // pred_fallthru
      _
    // Predicated region
    $region14: #{tpu_custom_call.1} parent=1 // pred_check
      _
    $region15: #{tpu_custom_call.1} parent=1 // pred_check_branch
      %43 = sbr.rel (0) target = $region17
    $region16: #{tpu_custom_call.1} parent=1 // pred_region
      _
    $region17: #{tpu_custom_call.1} parent=1 // pred_fallthru
      _
    // Predicated region
    $region18: #{tpu_custom_call.1} parent=1 // pred_check
      _
    $region19: #{tpu_custom_call.1} parent=1 // pred_check_branch
      %45 = sbr.rel (0) target = $region21
    $region20: #{tpu_custom_call.1} parent=1 // pred_region
      %46 = dma.done [#allocation3], 256
    $region21: #{tpu_custom_call.1} parent=1 // pred_fallthru
      _
    // Predicated region
    $region22: #{tpu_custom_call.1} parent=1 // pred_check
      _
    $region23: #{tpu_custom_call.1} parent=1 // pred_check_branch
      %48 = sbr.rel (0) target = $region25
    $region24: #{tpu_custom_call.1} parent=1 // pred_region
      %49 = dma.done [#allocation6], 128
    $region25: #{tpu_custom_call.1} parent=1 // pred_fallthru
      _
    // Predicated region
    $region26: #{tpu_custom_call.1} parent=1 // pred_check
      _
    $region27: #{tpu_custom_call.1} parent=1 // pred_check_branch
      %51 = sbr.rel (0) target = $region29
    $region28: #{tpu_custom_call.1} parent=1 // pred_region
      %52 = dma.done [#allocation6], 128
    $region29: #{tpu_custom_call.1} parent=1 // pred_fallthru
      _
    %v53 = vld [vmem:[#allocation2] sm:$0xff]
    %v54 = vld [vmem:[#allocation2 + $0x8] sm:$0xff]
    %v55 = vld [vmem:[#allocation5] sm:$0xff]
    %v57 = vlaneseq
    %v58 = vshrl.u32 %v57, 7
    %v59 = vsub.s32 0, %v58
    %v60 = vrot.slane %v55, %v59
    %v61 = vlaneseq
    %v62 = vshrl.u32 %v61, 7
    %v63 = vsub.s32 1, %v62
    %v64 = vrot.slane %v55, %v63
    %v65 = vlaneseq
    %v66 = vshrl.u32 %v65, 7
    %v67 = vsub.s32 2, %v66
    %v68 = vrot.slane %v55, %v67
    %v69 = vlaneseq
    %v70 = vshrl.u32 %v69, 7
    %v71 = vsub.s32 3, %v70
    %v72 = vrot.slane %v55, %v71
    %v73 = vlaneseq
    %v74 = vshrl.u32 %v73, 7
    %v75 = vsub.s32 4, %v74
    %v76 = vrot.slane %v55, %v75
    %v77 = vlaneseq
    %v78 = vshrl.u32 %v77, 7
    %v79 = vsub.s32 5, %v78
    %v80 = vrot.slane %v55, %v79
    %v81 = vlaneseq
    %v82 = vshrl.u32 %v81, 7
    %v83 = vsub.s32 6, %v82
    %v84 = vrot.slane %v55, %v83
    %v85 = vlaneseq
    %v86 = vshrl.u32 %v85, 7
    %v87 = vsub.s32 7, %v86
    %v88 = vrot.slane %v55, %v87
    %v89 = vcombine.low %v60, %v64
    %v90 = vcombine.low %v68, %v72
    %v92 = vunpack.c.l.s4 1983009808
    %v93 = vunpack.c.0.s8 %v92
    %v94 = vlaneseq
    %v95 = vshrl.u32 %v94, 7
    %v96 = vsub.s32 %v93, %v95
    %v97 = vrot.slane %v89, %v96
    %v99 = vunpack.c.l.s4 1983009808
    %v100 = vunpack.c.0.s8 %v99
    %v101 = vlaneseq
    %v102 = vshrl.u32 %v101, 7
    %v103 = vsub.s32 %v100, %v102
    %v104 = vrot.slane %v90, %v103
    %v105 = vcombine.low %v97, %v104
    %v106 = vcombine.low %v76, %v80
    %v107 = vcombine.low %v84, %v88
    %v109 = vunpack.c.l.s4 1983009808
    %v110 = vunpack.c.0.s8 %v109
    %v111 = vlaneseq
    %v112 = vshrl.u32 %v111, 7
    %v113 = vsub.s32 %v110, %v112
    %v114 = vrot.slane %v106, %v113
    %v116 = vunpack.c.l.s4 1983009808
    %v117 = vunpack.c.0.s8 %v116
    %v118 = vlaneseq
    %v119 = vshrl.u32 %v118, 7
    %v120 = vsub.s32 %v117, %v119
    %v121 = vrot.slane %v107, %v120
    %v122 = vcombine.low %v114, %v121
    %v125 = vsub.f32 %v53, %v105
    %v126 = vsub.f32 %v54, %v122
    %v127 = vmul.f32 %v125, %v125
    %v128 = vmul.f32 %v126, %v126
    %v129 = vld [vmem:[#allocation7] sm:$0xff]
    %v131 = vlaneseq
    %v132 = vshrl.u32 %v131, 7
    %v133 = vsub.s32 0, %v132
    %v134 = vrot.slane %v129, %v133
    %v135 = vlaneseq
    %v136 = vshrl.u32 %v135, 7
    %v137 = vsub.s32 1, %v136
    %v138 = vrot.slane %v129, %v137
    %v139 = vlaneseq
    %v140 = vshrl.u32 %v139, 7
    %v141 = vsub.s32 2, %v140
    %v142 = vrot.slane %v129, %v141
    %v143 = vlaneseq
    %v144 = vshrl.u32 %v143, 7
    %v145 = vsub.s32 3, %v144
    %v146 = vrot.slane %v129, %v145
    %v147 = vlaneseq
    %v148 = vshrl.u32 %v147, 7
    %v149 = vsub.s32 4, %v148
    %v150 = vrot.slane %v129, %v149
    %v151 = vlaneseq
    %v152 = vshrl.u32 %v151, 7
    %v153 = vsub.s32 5, %v152
    %v154 = vrot.slane %v129, %v153
    %v155 = vlaneseq
    %v156 = vshrl.u32 %v155, 7
    %v157 = vsub.s32 6, %v156
    %v158 = vrot.slane %v129, %v157
    %v159 = vlaneseq
    %v160 = vshrl.u32 %v159, 7
    %v161 = vsub.s32 7, %v160
    %v162 = vrot.slane %v129, %v161
    %v163 = vcombine.low %v134, %v138
    %v164 = vcombine.low %v142, %v146
    %v166 = vunpack.c.l.s4 1983009808
    %v167 = vunpack.c.0.s8 %v166
    %v168 = vlaneseq
    %v169 = vshrl.u32 %v168, 7
    %v170 = vsub.s32 %v167, %v169
    %v171 = vrot.slane %v163, %v170
    %v173 = vunpack.c.l.s4 1983009808
    %v174 = vunpack.c.0.s8 %v173
    %v175 = vlaneseq
    %v176 = vshrl.u32 %v175, 7
    %v177 = vsub.s32 %v174, %v176
    %v178 = vrot.slane %v164, %v177
    %v179 = vcombine.low %v171, %v178
    %v180 = vcombine.low %v150, %v154
    %v181 = vcombine.low %v158, %v162
    %v183 = vunpack.c.l.s4 1983009808
    %v184 = vunpack.c.0.s8 %v183
    %v185 = vlaneseq
    %v186 = vshrl.u32 %v185, 7
    %v187 = vsub.s32 %v184, %v186
    %v188 = vrot.slane %v180, %v187
    %v190 = vunpack.c.l.s4 1983009808
    %v191 = vunpack.c.0.s8 %v190
    %v192 = vlaneseq
    %v193 = vshrl.u32 %v192, 7
    %v194 = vsub.s32 %v191, %v193
    %v195 = vrot.slane %v181, %v194
    %v196 = vcombine.low %v188, %v195
    %v199 = vmul.f32 %v127, %v179
    %v200 = vmul.f32 %v128, %v196
    %v201 = vmul.f32 %v199, 1.442695
    %v202 = vpow.pop %v201
    %v203 = vmul.f32 %v200, 1.442695
    %v204 = vpow.pop %v203
    %v205 = vld [vmem:[%s3] sm:$0xff]
    %v207 = vlaneseq
    %v208 = vshrl.u32 %v207, 7
    %v209 = vsub.s32 0, %v208
    %v210 = vrot.slane %v205, %v209
    %v211 = vlaneseq
    %v212 = vshrl.u32 %v211, 7
    %v213 = vsub.s32 1, %v212
    %v214 = vrot.slane %v205, %v213
    %v215 = vlaneseq
    %v216 = vshrl.u32 %v215, 7
    %v217 = vsub.s32 2, %v216
    %v218 = vrot.slane %v205, %v217
    %v219 = vlaneseq
    %v220 = vshrl.u32 %v219, 7
    %v221 = vsub.s32 3, %v220
    %v222 = vrot.slane %v205, %v221
    %v223 = vlaneseq
    %v224 = vshrl.u32 %v223, 7
    %v225 = vsub.s32 4, %v224
    %v226 = vrot.slane %v205, %v225
    %v227 = vlaneseq
    %v228 = vshrl.u32 %v227, 7
    %v229 = vsub.s32 5, %v228
    %v230 = vrot.slane %v205, %v229
    %v231 = vlaneseq
    %v232 = vshrl.u32 %v231, 7
    %v233 = vsub.s32 6, %v232
    %v234 = vrot.slane %v205, %v233
    %v235 = vlaneseq
    %v236 = vshrl.u32 %v235, 7
    %v237 = vsub.s32 7, %v236
    %v238 = vrot.slane %v205, %v237
    %v239 = vcombine.low %v210, %v214
    %v240 = vcombine.low %v218, %v222
    %v242 = vunpack.c.l.s4 1983009808
    %v243 = vunpack.c.0.s8 %v242
    %v244 = vlaneseq
    %v245 = vshrl.u32 %v244, 7
    %v246 = vsub.s32 %v243, %v245
    %v247 = vrot.slane %v239, %v246
    %v249 = vunpack.c.l.s4 1983009808
    %v250 = vunpack.c.0.s8 %v249
    %v251 = vlaneseq
    %v252 = vshrl.u32 %v251, 7
    %v253 = vsub.s32 %v250, %v252
    %v254 = vrot.slane %v240, %v253
    %v255 = vcombine.low %v247, %v254
    %v256 = vcombine.low %v226, %v230
    %v257 = vcombine.low %v234, %v238
    %v259 = vunpack.c.l.s4 1983009808
    %v260 = vunpack.c.0.s8 %v259
    %v261 = vlaneseq
    %v262 = vshrl.u32 %v261, 7
    %v263 = vsub.s32 %v260, %v262
    %v264 = vrot.slane %v256, %v263
    %v266 = vunpack.c.l.s4 1983009808
    %v267 = vunpack.c.0.s8 %v266
    %v268 = vlaneseq
    %v269 = vshrl.u32 %v268, 7
    %v270 = vsub.s32 %v267, %v269
    %v271 = vrot.slane %v257, %v270
    %v272 = vcombine.low %v264, %v271
    %v275 = vmul.f32 %v202, %v255
    %v276 = vmul.f32 %v204, %v272
    %277 = vst [vmem:[#allocation8] sm:$0xff] %v275
    %278 = vst [vmem:[#allocation8 + $0x8] sm:$0xff] %v276
    // Predicated region
    $region30: #{tpu_custom_call.1} parent=1 // pred_check
      _
    $region31: #{tpu_custom_call.1} parent=1 // pred_check_branch
      %280 = sbr.rel (0) target = $region33
    $region32: #{tpu_custom_call.1} parent=1 // pred_region
      %s282 = ssub.s32 256, 256
      %283 = vsyncadd [#allocation4], %s282
      %s285 = sshll.u32 [#allocation8], 4
      %s286 = int_to_ptr.vmem [resolvable:$true] %s285
      %288 = dma.vmem_to_hbm [thread:$0]  %s286, 256, %s4, [#allocation4]
    $region33: #{tpu_custom_call.1} parent=1 // pred_fallthru
      _
    // Predicated region
    $region34: #{tpu_custom_call.1} parent=1 // pred_check
      _
    $region35: #{tpu_custom_call.1} parent=1 // pred_check_branch
      %290 = sbr.rel (0) target = $region37
    $region36: #{tpu_custom_call.1} parent=1 // pred_region
      %291 = dma.done [#allocation4], 256
    $region37: #{tpu_custom_call.1} parent=1 // pred_fallthru
      _
    %292 = vsyncpa [#allocation3], 1
    %293 = vsyncpa [#allocation6], 1
    %294 = vsyncpa [#allocation4], 1

</llo_original>
